<compile_context>
chip_gen: v7x
topology: tpu7x:2x2x1
jax: 0.10.0
libtpu: 0.0.40
codegen_flags: <defaults>
</compile_context>

<pallas_src>
import math

import jax
import jax.numpy as jnp
from jax.experimental import pallas as pl
from jax.experimental.pallas import tpu as pltpu


# ----------------------------------------------------------------------------
# Kernel 1: fused STGCN block body (everything except the batch-norm).
# Grid over batches; block for x is (1, N, T*Cin); weights are small resident blocks.
# ----------------------------------------------------------------------------
def _stgcn_fused_kernel(x_ref, a_ref, w1_ref, b1_ref, th_ref, w2_ref, b2_ref, o_ref):
    tc = o_ref.shape[2]                       # T * out_channels

    def time_block(x, w_ref, b_ref):
        # x: (rows, T*Cin).  The banded weight fuses the 3 taps, the zero padding and
        # the 3 conv branches into one GEMM; outputs are branch-major along lanes.
        g = jnp.dot(x, w_ref[...], preferred_element_type=jnp.float32) + b_ref[...]
        y1 = g[:, :tc]
        y2 = g[:, tc:2 * tc]
        y3 = g[:, 2 * tc:]
        return jnp.maximum(y1 + jax.nn.sigmoid(y2) + y3, 0.0)

    x = x_ref[0]                                                      # (N, T*Cin)
    t = time_block(x, w1_ref, b1_ref)                                 # (N, T*Cout)
    u = jnp.dot(t, th_ref[...], preferred_element_type=jnp.float32)   # (N, T*Csp)
    t2 = jnp.maximum(                                                 # graph conv + relu
        jnp.dot(a_ref[...], u, preferred_element_type=jnp.float32), 0.0)
    t3 = time_block(t2, w2_ref, b2_ref)                               # (N, T*Cout)
    o_ref[0] = t3.astype(o_ref.dtype)


# ----------------------------------------------------------------------------
# Kernel 2: BatchNorm2d(num_nodes), training-mode batch statistics.
# Per-node stats over (batch, time, channel); node tiles in the sublane dim.
# ----------------------------------------------------------------------------
def _bn_kernel(x_ref, gamma_ref, beta_ref, o_ref):
    x = x_ref[...]                                        # (B, nt, T*C)
    count = x.shape[0] * x.shape[2]
    s = jnp.sum(jnp.sum(x, axis=2, keepdims=True), axis=0, keepdims=True)
    mu = s / count                                        # (1, nt, 1)
    d = x - mu
    var = jnp.sum(jnp.sum(d * d, axis=2, keepdims=True), axis=0, keepdims=True) / count
    inv = jax.lax.rsqrt(var + 1e-5)
    o_ref[...] = (d * inv * gamma_ref[...] + beta_ref[...]).astype(o_ref.dtype)
    # TODO(synk): running_mean / running_var buffers are not tracked (forward output
    #             of training-mode BN is unaffected).


# ----------------------------------------------------------------------------
# Wrapper-side weight preprocessing (tiny, runs under jit).
# ----------------------------------------------------------------------------
def _banded_time_weight(ws, T):
    """Three (3, Cin, Cout) conv branches -> (T*Cin, 3*T*Cout) banded GEMM weight.

    With x flattened to (rows, T*Cin), `x @ W` equals the three 'same'-padded (pad=1)
    3-tap temporal convs, laid out branch-major then time-major then channel along lanes.
    """
    _, cin, cout = ws[0].shape
    W = jnp.zeros((T * cin, 3 * T * cout), jnp.float32)
    for br, w in enumerate(ws):
        for t in range(T):
            for k in range(3):
                ti = t + k - 1            # input timestep read by tap k (pad = 1)
                if 0 <= ti < T:
                    W = W.at[ti * cin:(ti + 1) * cin,
                             br * T * cout + t * cout:
                             br * T * cout + (t + 1) * cout].set(w[k])
    return W


def _tiled_bias(bs, T):
    return jnp.concatenate([jnp.tile(b, T) for b in bs]).reshape(1, -1)


# ----------------------------------------------------------------------------
# Full STGCNBlock forward (Pallas) and a pure-JAX reference.
# ----------------------------------------------------------------------------
@jax.jit
def stgcn_block_forward(X, A_hat, params):
    B, N, T, Cin = X.shape
    Cout = params["w_a"][0].shape[-1]
    Csp = params["Theta1"].shape[1]
    TC, TS = T * Cout, T * Csp

    W1 = _banded_time_weight(params["w_a"], T)                        # (T*Cin, 3*TC)
    b1 = _tiled_bias(params["b_a"], T)                                # (1, 3*TC)
    Th = jnp.kron(jnp.eye(T, dtype=jnp.float32), params["Theta1"])    # (TC, TS)
    W2 = _banded_time_weight(params["w_b"], T)                        # (TS, 3*TC)
    b2 = _tiled_bias(params["b_b"], T)                                # (1, 3*TC)

    x2 = X.reshape(B, N, T * Cin)   # layout-free reshape; (time, channel) in lanes

    # TODO(synk): for very large graphs (N >~ 2000) tile A_hat / the node dim and set
    #             vmem_limit_bytes so resident blocks stay inside v7x's 64 MiB VMEM.
    t3 = pl.pallas_call(
        _stgcn_fused_kernel,
        out_shape=jax.ShapeDtypeStruct((B, N, TC), jnp.float32),
        grid=(B,),
        in_specs=[
            pl.BlockSpec((1, N, T * Cin), lambda b: (b, 0, 0)),
            pl.BlockSpec((N, N), lambda b: (0, 0)),
            pl.BlockSpec((T * Cin, 3 * TC), lambda b: (0, 0)),
            pl.BlockSpec((1, 3 * TC), lambda b: (0, 0)),
            pl.BlockSpec((TC, TS), lambda b: (0, 0)),
            pl.BlockSpec((TS, 3 * TC), lambda b: (0, 0)),
            pl.BlockSpec((1, 3 * TC), lambda b: (0, 0)),
        ],
        out_specs=pl.BlockSpec((1, N, TC), lambda b: (b, 0, 0)),
        compiler_params=pltpu.CompilerParams(dimension_semantics=("parallel",)),
    )(x2, A_hat, W1, b1, Th, W2, b2)

    gamma3 = params["gamma"].reshape(1, N, 1)
    beta3 = params["beta"].reshape(1, N, 1)
    nt = N if (N <= 128 or N % 8 != 0) else 128
    out = pl.pallas_call(
        _bn_kernel,
        out_shape=jax.ShapeDtypeStruct((B, N, TC), jnp.float32),
        grid=(pl.cdiv(N, nt),),
        in_specs=[
            pl.BlockSpec((B, nt, TC), lambda i: (0, i, 0)),
            pl.BlockSpec((1, nt, 1), lambda i: (0, i, 0)),
            pl.BlockSpec((1, nt, 1), lambda i: (0, i, 0)),
        ],
        out_specs=pl.BlockSpec((B, nt, TC), lambda i: (0, i, 0)),
        compiler_params=pltpu.CompilerParams(dimension_semantics=("parallel",)),
    )(t3, gamma3, beta3)

    return out.reshape(B, N, T, Cout)


def _time_block_ref(x, weights, biases):
    B, N, T, Cin = x.shape
    xp = jnp.pad(x, ((0, 0), (0, 0), (1, 1), (0, 0)))

    def conv(w, b):
        return sum(jnp.einsum("bntc,cd->bntd", xp[:, :, k:k + T, :], w[k])
                   for k in range(3)) + b

    y1 = conv(weights[0], biases[0])
    y2 = conv(weights[1], biases[1])
    y3 = conv(weights[2], biases[2])
    return jax.nn.relu(y1 + jax.nn.sigmoid(y2) + y3)


def stgcn_block_reference(X, A_hat, params):
    t = _time_block_ref(X, params["w_a"], params["b_a"])
    lfs = jnp.einsum("ij,bjtc->bitc", A_hat, t)
    t2 = jax.nn.relu(lfs @ params["Theta1"])
    t3 = _time_block_ref(t2, params["w_b"], params["b_b"])
    mu = jnp.mean(t3, axis=(0, 2, 3), keepdims=True)
    var = jnp.mean((t3 - mu) ** 2, axis=(0, 2, 3), keepdims=True)
    g = params["gamma"].reshape(1, -1, 1, 1)
    b = params["beta"].reshape(1, -1, 1, 1)
    return (t3 - mu) * jax.lax.rsqrt(var + 1e-5) * g + b


def init_params(key, in_channels, spatial_channels, out_channels, num_nodes):
    ks = jax.random.split(key, 16)
    ki = iter(ks)

    def conv_params(cin, cout):
        bound = 1.0 / math.sqrt(cin * 3)
        ws, bs = [], []
        for _ in range(3):
            ws.append(jax.random.uniform(next(ki), (3, cin, cout),
                                         minval=-bound, maxval=bound,
                                         dtype=jnp.float32))
            bs.append(jax.random.uniform(next(ki), (cout,),
                                         minval=-bound, maxval=bound,
                                         dtype=jnp.float32))
        return tuple(ws), tuple(bs)

    w_a, b_a = conv_params(in_channels, out_channels)       # temporal1
    w_b, b_b = conv_params(spatial_channels, out_channels)  # temporal2
    stdv = 1.0 / math.sqrt(spatial_channels)
    Theta1 = jax.random.uniform(next(ki), (out_channels, spatial_channels),
                                minval=-stdv, maxval=stdv, dtype=jnp.float32)
    gamma = jnp.ones((num_nodes,), jnp.float32)   # BatchNorm2d default init
    beta = jnp.zeros((num_nodes,), jnp.float32)
    return dict(w_a=w_a, b_a=b_a, w_b=w_b, b_b=b_b,
                Theta1=Theta1, gamma=gamma, beta=beta)


if __name__ == "__main__":
    # Small deterministic problem: B=2, N=8 nodes, T=12 timesteps,
    # in_channels=4, spatial_channels=16, out_channels=8.
    B, N, T = 2, 8, 12
    in_channels, spatial_channels, out_channels = 4, 16, 8

    key = jax.random.PRNGKey(0)
    k_x, k_a, k_p = jax.random.split(key, 3)

    X = jax.random.normal(k_x, (B, N, T, in_channels), dtype=jnp.float32)
    # Symmetric, roughly normalized adjacency (values only need to be deterministic).
    A = jax.random.uniform(k_a, (N, N), dtype=jnp.float32)
    A_hat = (A + A.T) / (2.0 * N)

    params = init_params(k_p, in_channels, spatial_channels, out_channels, N)

    out = stgcn_block_forward(X, A_hat, params)
    out = jax.block_until_ready(out)

    ref = stgcn_block_reference(X, A_hat, params)
    assert out.shape == (B, N, T, out_channels), out.shape
    max_err = float(jnp.max(jnp.abs(out - ref)))
    assert max_err < 1e-3, f"max abs error {max_err}"

    print("KERNEL_OK")
</pallas_src>

<mosaic_0001>
module attributes {stable_mosaic.version = 11 : i64} {
  func.func @_stgcn_fused_kernel(%arg0: i32, %arg1: memref<1x8x48xf32, #tpu.memory_space<vmem>>, %arg2: memref<8x8xf32, #tpu.memory_space<vmem>>, %arg3: memref<48x288xf32, #tpu.memory_space<vmem>>, %arg4: memref<1x288xf32, #tpu.memory_space<vmem>>, %arg5: memref<96x192xf32, #tpu.memory_space<vmem>>, %arg6: memref<192x288xf32, #tpu.memory_space<vmem>>, %arg7: memref<1x288xf32, #tpu.memory_space<vmem>>, %arg8: memref<1x8x96xf32, #tpu.memory_space<vmem>>) attributes {dimension_semantics = [#tpu.dimension_semantics<parallel>], iteration_bounds = array<i64: 2>, scalar_prefetch = 0 : i64, scratch_operands = 0 : i64, tpu.core_type = #tpu.core_type<tc>, window_params = [{transform_indices = @transform_0, window_bounds = array<i64: 1, 8, 48>}, {pipeline_mode = #tpu.pipeline_mode<synchronous>, transform_indices = @transform_1, window_bounds = array<i64: 8, 8>}, {pipeline_mode = #tpu.pipeline_mode<synchronous>, transform_indices = @transform_2, window_bounds = array<i64: 48, 288>}, {pipeline_mode = #tpu.pipeline_mode<synchronous>, transform_indices = @transform_3, window_bounds = array<i64: 1, 288>}, {pipeline_mode = #tpu.pipeline_mode<synchronous>, transform_indices = @transform_4, window_bounds = array<i64: 96, 192>}, {pipeline_mode = #tpu.pipeline_mode<synchronous>, transform_indices = @transform_5, window_bounds = array<i64: 192, 288>}, {pipeline_mode = #tpu.pipeline_mode<synchronous>, transform_indices = @transform_6, window_bounds = array<i64: 1, 288>}, {transform_indices = @transform_7, window_bounds = array<i64: 1, 8, 96>}]} {
    %c0 = arith.constant 0 : index
    %c0_0 = arith.constant 0 : index
    %c0_1 = arith.constant 0 : index
    %0 = vector.load %arg1[%c0, %c0_0, %c0_1] : memref<1x8x48xf32, #tpu.memory_space<vmem>>, vector<1x8x48xf32>
    %1 = vector.shape_cast %0 : vector<1x8x48xf32> to vector<8x48xf32>
    %c0_2 = arith.constant 0 : index
    %c0_3 = arith.constant 0 : index
    %2 = vector.load %arg3[%c0_2, %c0_3] : memref<48x288xf32, #tpu.memory_space<vmem>>, vector<48x288xf32>
    %cst = arith.constant dense<0.000000e+00> : vector<8x288xf32>
    %3 = tpu.matmul %1, %2, %cst {dimension_numbers = #tpu.dot_dimension_numbers<[1], [0], [0], [1], [0, 0, 1, 1], [], []>} : vector<8x48xf32>, vector<48x288xf32>, vector<8x288xf32> -> vector<8x288xf32>
    %c0_4 = arith.constant 0 : index
    %c0_5 = arith.constant 0 : index
    %4 = vector.load %arg4[%c0_4, %c0_5] : memref<1x288xf32, #tpu.memory_space<vmem>>, vector<1x288xf32>
    %5 = vector.broadcast %4 : vector<1x288xf32> to vector<8x288xf32>
    %6 = arith.addf %3, %5 : vector<8x288xf32>
    %7 = vector.extract_strided_slice %6 {offsets = [0, 0], sizes = [8, 96], strides = [1, 1]} : vector<8x288xf32> to vector<8x96xf32>
    %8 = vector.extract_strided_slice %6 {offsets = [0, 96], sizes = [8, 96], strides = [1, 1]} : vector<8x288xf32> to vector<8x96xf32>
    %9 = vector.extract_strided_slice %6 {offsets = [0, 192], sizes = [8, 96], strides = [1, 1]} : vector<8x288xf32> to vector<8x96xf32>
    %10 = arith.negf %8 : vector<8x96xf32>
    %11 = math.exp %10 : vector<8x96xf32>
    %cst_6 = arith.constant 1.000000e+00 : f32
    %12 = vector.broadcast %cst_6 : f32 to vector<8x96xf32>
    %13 = arith.addf %12, %11 : vector<8x96xf32>
    %14 = arith.divf %12, %13 : vector<8x96xf32>
    %15 = arith.addf %7, %14 : vector<8x96xf32>
    %16 = arith.addf %15, %9 : vector<8x96xf32>
    %cst_7 = arith.constant 0.000000e+00 : f32
    %17 = vector.broadcast %cst_7 : f32 to vector<8x96xf32>
    %18 = arith.maximumf %16, %17 : vector<8x96xf32>
    %c0_8 = arith.constant 0 : index
    %c0_9 = arith.constant 0 : index
    %19 = vector.load %arg5[%c0_8, %c0_9] : memref<96x192xf32, #tpu.memory_space<vmem>>, vector<96x192xf32>
    %cst_10 = arith.constant dense<0.000000e+00> : vector<8x192xf32>
    %20 = tpu.matmul %18, %19, %cst_10 {dimension_numbers = #tpu.dot_dimension_numbers<[1], [0], [0], [1], [0, 0, 1, 1], [], []>} : vector<8x96xf32>, vector<96x192xf32>, vector<8x192xf32> -> vector<8x192xf32>
    %c0_11 = arith.constant 0 : index
    %c0_12 = arith.constant 0 : index
    %21 = vector.load %arg2[%c0_11, %c0_12] : memref<8x8xf32, #tpu.memory_space<vmem>>, vector<8x8xf32>
    %cst_13 = arith.constant dense<0.000000e+00> : vector<8x192xf32>
    %22 = tpu.matmul %21, %20, %cst_13 {dimension_numbers = #tpu.dot_dimension_numbers<[1], [0], [0], [1], [0, 0, 1, 1], [], []>} : vector<8x8xf32>, vector<8x192xf32>, vector<8x192xf32> -> vector<8x192xf32>
    %cst_14 = arith.constant 0.000000e+00 : f32
    %23 = vector.broadcast %cst_14 : f32 to vector<8x192xf32>
    %24 = arith.maximumf %22, %23 : vector<8x192xf32>
    %c0_15 = arith.constant 0 : index
    %c0_16 = arith.constant 0 : index
    %25 = vector.load %arg6[%c0_15, %c0_16] : memref<192x288xf32, #tpu.memory_space<vmem>>, vector<192x288xf32>
    %cst_17 = arith.constant dense<0.000000e+00> : vector<8x288xf32>
    %26 = tpu.matmul %24, %25, %cst_17 {dimension_numbers = #tpu.dot_dimension_numbers<[1], [0], [0], [1], [0, 0, 1, 1], [], []>} : vector<8x192xf32>, vector<192x288xf32>, vector<8x288xf32> -> vector<8x288xf32>
    %c0_18 = arith.constant 0 : index
    %c0_19 = arith.constant 0 : index
    %27 = vector.load %arg7[%c0_18, %c0_19] : memref<1x288xf32, #tpu.memory_space<vmem>>, vector<1x288xf32>
    %28 = vector.broadcast %27 : vector<1x288xf32> to vector<8x288xf32>
    %29 = arith.addf %26, %28 : vector<8x288xf32>
    %30 = vector.extract_strided_slice %29 {offsets = [0, 0], sizes = [8, 96], strides = [1, 1]} : vector<8x288xf32> to vector<8x96xf32>
    %31 = vector.extract_strided_slice %29 {offsets = [0, 96], sizes = [8, 96], strides = [1, 1]} : vector<8x288xf32> to vector<8x96xf32>
    %32 = vector.extract_strided_slice %29 {offsets = [0, 192], sizes = [8, 96], strides = [1, 1]} : vector<8x288xf32> to vector<8x96xf32>
    %33 = arith.negf %31 : vector<8x96xf32>
    %34 = math.exp %33 : vector<8x96xf32>
    %cst_20 = arith.constant 1.000000e+00 : f32
    %35 = vector.broadcast %cst_20 : f32 to vector<8x96xf32>
    %36 = arith.addf %35, %34 : vector<8x96xf32>
    %37 = arith.divf %35, %36 : vector<8x96xf32>
    %38 = arith.addf %30, %37 : vector<8x96xf32>
    %39 = arith.addf %38, %32 : vector<8x96xf32>
    %cst_21 = arith.constant 0.000000e+00 : f32
    %40 = vector.broadcast %cst_21 : f32 to vector<8x96xf32>
    %41 = arith.maximumf %39, %40 : vector<8x96xf32>
    %c0_22 = arith.constant 0 : index
    %c0_23 = arith.constant 0 : index
    %c0_24 = arith.constant 0 : index
    %42 = vector.load %arg8[%c0_22, %c0_23, %c0_24] : memref<1x8x96xf32, #tpu.memory_space<vmem>>, vector<1x8x96xf32>
    %43 = vector.shape_cast %42 : vector<1x8x96xf32> to vector<8x96xf32>
    %44 = vector.shape_cast %41 : vector<8x96xf32> to vector<1x8x96xf32>
    tpu.vector_store %arg8[%c0_22, %c0_23, %c0_24], %44 {strides = array<i32>} : memref<1x8x96xf32, #tpu.memory_space<vmem>>, vector<1x8x96xf32>,
    return
  }
  func.func @transform_0(%arg0: i32) -> (i32, i32, i32) {
    %c0_i32 = arith.constant 0 : i32
    %c0_i32_0 = arith.constant 0 : i32
    %c0_i32_1 = arith.constant 0 : i32
    return %arg0, %c0_i32, %c0_i32_0 : i32, i32, i32
  }
  func.func @transform_1(%arg0: i32) -> (i32, i32) {
    %c0_i32 = arith.constant 0 : i32
    %c0_i32_0 = arith.constant 0 : i32
    %c0_i32_1 = arith.constant 0 : i32
    return %c0_i32, %c0_i32_0 : i32, i32
  }
  func.func @transform_2(%arg0: i32) -> (i32, i32) {
    %c0_i32 = arith.constant 0 : i32
    %c0_i32_0 = arith.constant 0 : i32
    %c0_i32_1 = arith.constant 0 : i32
    return %c0_i32, %c0_i32_0 : i32, i32
  }
  func.func @transform_3(%arg0: i32) -> (i32, i32) {
    %c0_i32 = arith.constant 0 : i32
    %c0_i32_0 = arith.constant 0 : i32
    %c0_i32_1 = arith.constant 0 : i32
    return %c0_i32, %c0_i32_0 : i32, i32
  }
  func.func @transform_4(%arg0: i32) -> (i32, i32) {
    %c0_i32 = arith.constant 0 : i32
    %c0_i32_0 = arith.constant 0 : i32
    %c0_i32_1 = arith.constant 0 : i32
    return %c0_i32, %c0_i32_0 : i32, i32
  }
  func.func @transform_5(%arg0: i32) -> (i32, i32) {
    %c0_i32 = arith.constant 0 : i32
    %c0_i32_0 = arith.constant 0 : i32
    %c0_i32_1 = arith.constant 0 : i32
    return %c0_i32, %c0_i32_0 : i32, i32
  }
  func.func @transform_6(%arg0: i32) -> (i32, i32) {
    %c0_i32 = arith.constant 0 : i32
    %c0_i32_0 = arith.constant 0 : i32
    %c0_i32_1 = arith.constant 0 : i32
    return %c0_i32, %c0_i32_0 : i32, i32
  }
  func.func @transform_7(%arg0: i32) -> (i32, i32, i32) {
    %c0_i32 = arith.constant 0 : i32
    %c0_i32_0 = arith.constant 0 : i32
    %c0_i32_1 = arith.constant 0 : i32
    return %arg0, %c0_i32, %c0_i32_0 : i32, i32, i32
  }
}

module attributes {stable_mosaic.version = 11 : i64} {
  func.func @_bn_kernel(%arg0: i32, %arg1: memref<2x8x96xf32, #tpu.memory_space<vmem>>, %arg2: memref<1x8x1xf32, #tpu.memory_space<vmem>>, %arg3: memref<1x8x1xf32, #tpu.memory_space<vmem>>, %arg4: memref<2x8x96xf32, #tpu.memory_space<vmem>>) attributes {dimension_semantics = [#tpu.dimension_semantics<parallel>], iteration_bounds = array<i64: 1>, scalar_prefetch = 0 : i64, scratch_operands = 0 : i64, tpu.core_type = #tpu.core_type<tc>, window_params = [{transform_indices = @transform_0, window_bounds = array<i64: 2, 8, 96>}, {transform_indices = @transform_1, window_bounds = array<i64: 1, 8, 1>}, {transform_indices = @transform_2, window_bounds = array<i64: 1, 8, 1>}, {transform_indices = @transform_3, window_bounds = array<i64: 2, 8, 96>}]} {
    %c0 = arith.constant 0 : index
    %c0_0 = arith.constant 0 : index
    %c0_1 = arith.constant 0 : index
    %0 = vector.load %arg1[%c0, %c0_0, %c0_1] : memref<2x8x96xf32, #tpu.memory_space<vmem>>, vector<2x8x96xf32>
    %cst = arith.constant dense<0.000000e+00> : vector<2x8xf32>
    %1 = vector.multi_reduction <add>, %0, %cst [2] : vector<2x8x96xf32> to vector<2x8xf32>
    %2 = vector.shape_cast %1 : vector<2x8xf32> to vector<2x8x1xf32>
    %cst_2 = arith.constant dense<0.000000e+00> : vector<8x1xf32>
    %3 = vector.multi_reduction <add>, %2, %cst_2 [0] : vector<2x8x1xf32> to vector<8x1xf32>
    %4 = vector.shape_cast %3 : vector<8x1xf32> to vector<1x8x1xf32>
    %cst_3 = arith.constant 1.920000e+02 : f32
    %5 = vector.broadcast %cst_3 : f32 to vector<1x8x1xf32>
    %6 = arith.divf %4, %5 : vector<1x8x1xf32>
    %7 = vector.broadcast %6 : vector<1x8x1xf32> to vector<2x8x96xf32>
    %8 = arith.subf %0, %7 : vector<2x8x96xf32>
    %9 = arith.mulf %8, %8 : vector<2x8x96xf32>
    %cst_4 = arith.constant dense<0.000000e+00> : vector<2x8xf32>
    %10 = vector.multi_reduction <add>, %9, %cst_4 [2] : vector<2x8x96xf32> to vector<2x8xf32>
    %11 = vector.shape_cast %10 : vector<2x8xf32> to vector<2x8x1xf32>
    %cst_5 = arith.constant dense<0.000000e+00> : vector<8x1xf32>
    %12 = vector.multi_reduction <add>, %11, %cst_5 [0] : vector<2x8x1xf32> to vector<8x1xf32>
    %13 = vector.shape_cast %12 : vector<8x1xf32> to vector<1x8x1xf32>
    %cst_6 = arith.constant 1.920000e+02 : f32
    %14 = vector.broadcast %cst_6 : f32 to vector<1x8x1xf32>
    %15 = arith.divf %13, %14 : vector<1x8x1xf32>
    %cst_7 = arith.constant 9.99999974E-6 : f32
    %16 = vector.broadcast %cst_7 : f32 to vector<1x8x1xf32>
    %17 = arith.addf %15, %16 : vector<1x8x1xf32>
    %18 = math.rsqrt %17 : vector<1x8x1xf32>
    %19 = vector.broadcast %18 : vector<1x8x1xf32> to vector<2x8x96xf32>
    %20 = arith.mulf %8, %19 : vector<2x8x96xf32>
    %c0_8 = arith.constant 0 : index
    %c0_9 = arith.constant 0 : index
    %c0_10 = arith.constant 0 : index
    %21 = vector.load %arg2[%c0_8, %c0_9, %c0_10] : memref<1x8x1xf32, #tpu.memory_space<vmem>>, vector<1x8x1xf32>
    %22 = vector.broadcast %21 : vector<1x8x1xf32> to vector<2x8x96xf32>
    %23 = arith.mulf %20, %22 : vector<2x8x96xf32>
    %c0_11 = arith.constant 0 : index
    %c0_12 = arith.constant 0 : index
    %c0_13 = arith.constant 0 : index
    %24 = vector.load %arg3[%c0_11, %c0_12, %c0_13] : memref<1x8x1xf32, #tpu.memory_space<vmem>>, vector<1x8x1xf32>
    %25 = vector.broadcast %24 : vector<1x8x1xf32> to vector<2x8x96xf32>
    %26 = arith.addf %23, %25 : vector<2x8x96xf32>
    %c0_14 = arith.constant 0 : index
    %c0_15 = arith.constant 0 : index
    %c0_16 = arith.constant 0 : index
    %27 = vector.load %arg4[%c0_14, %c0_15, %c0_16] : memref<2x8x96xf32, #tpu.memory_space<vmem>>, vector<2x8x96xf32>
    tpu.vector_store %arg4[%c0_14, %c0_15, %c0_16], %26 {strides = array<i32>} : memref<2x8x96xf32, #tpu.memory_space<vmem>>, vector<2x8x96xf32>,
    return
  }
  func.func @transform_0(%arg0: i32) -> (i32, i32, i32) {
    %c0_i32 = arith.constant 0 : i32
    %c0_i32_0 = arith.constant 0 : i32
    %c0_i32_1 = arith.constant 0 : i32
    return %c0_i32, %arg0, %c0_i32_0 : i32, i32, i32
  }
  func.func @transform_1(%arg0: i32) -> (i32, i32, i32) {
    %c0_i32 = arith.constant 0 : i32
    %c0_i32_0 = arith.constant 0 : i32
    %c0_i32_1 = arith.constant 0 : i32
    return %c0_i32, %arg0, %c0_i32_0 : i32, i32, i32
  }
  func.func @transform_2(%arg0: i32) -> (i32, i32, i32) {
    %c0_i32 = arith.constant 0 : i32
    %c0_i32_0 = arith.constant 0 : i32
    %c0_i32_1 = arith.constant 0 : i32
    return %c0_i32, %arg0, %c0_i32_0 : i32, i32, i32
  }
  func.func @transform_3(%arg0: i32) -> (i32, i32, i32) {
    %c0_i32 = arith.constant 0 : i32
    %c0_i32_0 = arith.constant 0 : i32
    %c0_i32_1 = arith.constant 0 : i32
    return %c0_i32, %arg0, %c0_i32_0 : i32, i32, i32
  }
}

</mosaic_0001>

<llo_original>
// kernel: tile.43
$region0: #{tile.43}
  #allocation0 [shape = 's32[1]{0}', space=sflag, size = 0x4, scoped, tag = 'scoped memory for tile.43']
  %s0 = inlined_call_operand.vmem [shape: f32[8], index: 0, kind: input, shape index: {}]
  %s1 = inlined_call_operand.vmem [shape: f32[12,8], index: 1, kind: output, shape index: {}]
  // Predicated region
  $region2: #{tile.43} parent=0 // pred_check
    _
  $region3: #{tile.43} parent=0 // pred_check_branch
    %3 = sbr.rel (0) target = $region5
  $region4: #{tile.43} parent=0 // pred_region
    _
  $region5: #{tile.43} parent=0 // pred_fallthru
    _
  %v4 = vld [vmem:[%s0] ss:$0 sm:$0xff]
  %5 = vst [vmem:[%s1] sm:$0xff] %v4
  %s6 = scalar_lea.vmem %s1, 8
  %7 = vst [vmem:[%s6] sm:$0xff] %v4

// kernel: tile.44
$region0: #{tile.44}
  %s0 = inlined_call_operand.vmem [shape: f32[12,8], index: 0, kind: input, shape index: {}]
  %s1 = inlined_call_operand.vmem [shape: f32[96], index: 1, kind: output, shape index: {}]
  $region1: #{tile.44} parent=0
    #allocation0 [shape = 'u8[4096]{0}', space=vmem, size = 0x1000, scoped, tag = 'scoped mem for output reshape']
    %v2 = vld [vmem:[%s0] sm:$0x1]
    %vm3 = vcmask 64512
    %4 = vst.msk [vmem:[#allocation0] sm:$0x1] %vm3, %v2
    %s5 = scalar_lea.vmem %s0, 11
    %v6 = vld [vmem:[%s5] sm:$0x1]
    %7 = vrot.lane.b32.xlu0 %v6, 88
    %v8 = vpop.permute.xlu0 %7
    %vm9 = vcmask 786112
    %10 = vst.msk [vmem:[#allocation0] sm:$0x1] %vm9, %v8
    %s11 = scalar_lea.vmem %s0, 10
    %v12 = vld [vmem:[%s11] sm:$0x1]
    %13 = vrot.lane.b32.xlu0 %v12, 80
    %v14 = vpop.permute.xlu0 %13
    %vm15 = vcmask 720512
    %16 = vst.msk [vmem:[#allocation0] sm:$0x1] %vm15, %v14
    %s17 = scalar_lea.vmem %s0, 9
    %v18 = vld [vmem:[%s17] sm:$0x1]
    %19 = vrot.lane.b32.xlu0 %v18, 72
    %v20 = vpop.permute.xlu0 %19
    %vm21 = vcmask 654912
    %22 = vst.msk [vmem:[#allocation0] sm:$0x1] %vm21, %v20
    %s23 = scalar_lea.vmem %s0, 8
    %v24 = vld [vmem:[%s23] sm:$0x1]
    %25 = vrot.lane.b32.xlu0 %v24, 64
    %v26 = vpop.permute.xlu0 %25
    %vm27 = vcmask 589312
    %28 = vst.msk [vmem:[#allocation0] sm:$0x1] %vm27, %v26
    %s29 = scalar_lea.vmem %s0, 7
    %v30 = vld [vmem:[%s29] sm:$0x1]
    %31 = vrot.lane.b32.xlu0 %v30, 56
    %v32 = vpop.permute.xlu0 %31
    %vm33 = vcmask 523712
    %34 = vst.msk [vmem:[#allocation0] sm:$0x1] %vm33, %v32
    %s35 = scalar_lea.vmem %s0, 6
    %v36 = vld [vmem:[%s35] sm:$0x1]
    %37 = vrot.lane.b32.xlu0 %v36, 48
    %v38 = vpop.permute.xlu0 %37
    %vm39 = vcmask 458112
    %40 = vst.msk [vmem:[#allocation0] sm:$0x1] %vm39, %v38
    %s41 = scalar_lea.vmem %s0, 5
    %v42 = vld [vmem:[%s41] sm:$0x1]
    %43 = vrot.lane.b32.xlu0 %v42, 40
    %v44 = vpop.permute.xlu0 %43
    %vm45 = vcmask 392512
    %46 = vst.msk [vmem:[#allocation0] sm:$0x1] %vm45, %v44
    %s47 = scalar_lea.vmem %s0, 4
    %v48 = vld [vmem:[%s47] sm:$0x1]
    %49 = vrot.lane.b32.xlu0 %v48, 32
    %v50 = vpop.permute.xlu0 %49
    %vm51 = vcmask 326912
    %52 = vst.msk [vmem:[#allocation0] sm:$0x1] %vm51, %v50
    %s53 = scalar_lea.vmem %s0, 3
    %v54 = vld [vmem:[%s53] sm:$0x1]
    %55 = vrot.lane.b32.xlu0 %v54, 24
    %v56 = vpop.permute.xlu0 %55
    %vm57 = vcmask 261312
    %58 = vst.msk [vmem:[#allocation0] sm:$0x1] %vm57, %v56
    %s59 = scalar_lea.vmem %s0, 2
    %v60 = vld [vmem:[%s59] sm:$0x1]
    %61 = vrot.lane.b32.xlu0 %v60, 16
    %v62 = vpop.permute.xlu0 %61
    %vm63 = vcmask 195712
    %64 = vst.msk [vmem:[#allocation0] sm:$0x1] %vm63, %v62
    %s65 = scalar_lea.vmem %s0, 1
    %v66 = vld [vmem:[%s65] sm:$0x1]
    %67 = vrot.lane.b32.xlu0 %v66, 8
    %v68 = vpop.permute.xlu0 %67
    %vm69 = vcmask 130112
    %70 = vst.msk [vmem:[#allocation0] sm:$0x1] %vm69, %v68
    %s72 = sshllo.u32 0, 1
    %v74 = vld [vmem:[#allocation0] sm:%s72]
    %s75 = sshllo.u32 0, 1
    %76 = vst [vmem:[%s1] sm:%s75] %v74

// kernel: stgcn_block_forward.3
$region0: #{stgcn_block_forward.3}
  #allocation0 [shape = 'u32[]', space=smem, size = 0x4, offset = 0x4, fixed_abs, tag = 'smem constant byte address 0x4 - core index']
  #allocation1 [shape = 'u32[144,128]{1,0:T(1,128)}', space=vmem, size = 0x12000, scoped, tag = 'internal scratch']
  %s0 = inlined_call_operand.vmem [shape: f32[2,8,96], index: 0, kind: input, shape index: {}]
  %s1 = inlined_call_operand.vmem [shape: f32[1,8,1], index: 1, kind: input, shape index: {}]
  %s2 = inlined_call_operand.vmem [shape: f32[1,8,1], index: 2, kind: input, shape index: {}]
  %s3 = inlined_call_operand.vmem [shape: f32[2,8,96], index: 3, kind: output, shape index: {}]
  %s4 = sld [smem:[#allocation0]]
  $region22: #{stgcn_block_forward.3} parent=0
    _
  %s6 = ssub.s32 1, %s4
  %s7 = scalar_select 0, %s6, %s4
  // Predicated region
  $region2: #{stgcn_block_forward.3} parent=0 // pred_check
    _
  $region3: #{stgcn_block_forward.3} parent=0 // pred_check_branch
    %9 = sbr.rel (0) target = $region5
  $region4: #{stgcn_block_forward.3} parent=0 // pred_region
    _
  $region5: #{stgcn_block_forward.3} parent=0 // pred_fallthru
    _
  // Predicated region
  $region6: #{stgcn_block_forward.3} parent=0 // pred_check
    _
  $region7: #{stgcn_block_forward.3} parent=0 // pred_check_branch
    %11 = sbr.rel (0) target = $region9
  $region8: #{stgcn_block_forward.3} parent=0 // pred_region
    _
  $region9: #{stgcn_block_forward.3} parent=0 // pred_fallthru
    _
  // Predicated region
  $region10: #{stgcn_block_forward.3} parent=0 // pred_check
    _
  $region11: #{stgcn_block_forward.3} parent=0 // pred_check_branch
    %13 = sbr.rel (0) target = $region13
  $region12: #{stgcn_block_forward.3} parent=0 // pred_region
    _
  $region13: #{stgcn_block_forward.3} parent=0 // pred_fallthru
    _
  %v14 = vld [vmem:[%s0] sm:$0xff]
  %v15 = vld [vmem:[%s0 + $0x8] sm:$0xff]
  %vm16 = vcmask 785408
  %v17 = vsel %vm16, %v14, 0.0
  %18 = vadd.xlane.f32.xlu0 %v17
  %v19 = vpop.xlane.xlu0 %18
  %v20 = vsel %vm16, %v15, 0.0
  %21 = vadd.xlane.f32.xlu0 %v20
  %v22 = vpop.xlane.xlu0 %21
  %v23 = vadd.f32 %v19, %v22
  %v24 = vrcp.pop 192.0
  %v25 = vmul.f32 %v23, %v24
  %v26 = vsub.f32 %v14, %v25
  %v27 = vsub.f32 %v15, %v25
  %v28 = vmul.f32 %v26, %v26
  %v29 = vmul.f32 %v27, %v27
  %v30 = vsel %vm16, %v28, 0.0
  %31 = vadd.xlane.f32.xlu0 %v30
  %v32 = vpop.xlane.xlu0 %31
  %v33 = vsel %vm16, %v29, 0.0
  %34 = vadd.xlane.f32.xlu0 %v33
  %v35 = vpop.xlane.xlu0 %34
  %v36 = vadd.f32 %v32, %v35
  %v37 = vmul.f32 %v36, %v24
  %v38 = vadd.f32 %v37, 1e-05
  %v39 = vrsqrt.pop %v38
  %v40 = vmul.f32 %v26, %v39
  %v41 = vmul.f32 %v27, %v39
  %v42 = vld [vmem:[%s1] sm:$0xff]
  %44 = vset.pattern.permute.xlu0 0
  %45 = vperm.xlu0 %44, %v42
  %v46 = vpop.permute.xlu0 %45
  %v48 = vmul.f32 %v40, %v46
  %v49 = vmul.f32 %v41, %v46
  %v50 = vld [vmem:[%s2] sm:$0xff]
  %52 = vset.pattern.permute.xlu0 0
  %53 = vperm.xlu0 %52, %v50
  %v54 = vpop.permute.xlu0 %53
  %v56 = vadd.f32 %v48, %v54
  %v57 = vadd.f32 %v49, %v54
  %58 = vst.msk [vmem:[%s3] sm:$0xff] %vm16, %v56
  %59 = vst.msk [vmem:[%s3 + $0x8] sm:$0xff] %vm16, %v57
  // Predicated region
  $region14: #{stgcn_block_forward.3} parent=0 // pred_check
    _
  $region15: #{stgcn_block_forward.3} parent=0 // pred_check_branch
    %61 = sbr.rel (0) target = $region17
  $region16: #{stgcn_block_forward.3} parent=0 // pred_region
    _
  $region17: #{stgcn_block_forward.3} parent=0 // pred_fallthru
    _
  // Predicated region
  $region18: #{stgcn_block_forward.3} parent=0 // pred_check
    _
  $region19: #{stgcn_block_forward.3} parent=0 // pred_check_branch
    %63 = sbr.rel (0) target = $region21
  $region20: #{stgcn_block_forward.3} parent=0 // pred_region
    _
  $region21: #{stgcn_block_forward.3} parent=0 // pred_fallthru
    _

// kernel: stgcn_block_forward.2
$region0: #{stgcn_block_forward.2}
  #allocation0 [shape = 'u32[]', space=smem, size = 0x4, offset = 0x4, fixed_abs, tag = 'smem constant byte address 0x4 - core index']
  #allocation1 [shape = 'u32[144,128]{1,0:T(1,128)}', space=vmem, size = 0x12000, scoped, tag = 'internal scratch']
  %s0 = inlined_call_operand.vmem [shape: f32[2,8,48], index: 0, kind: input, shape index: {}]
  %s1 = inlined_call_operand.vmem [shape: f32[8,8], index: 1, kind: input, shape index: {}]
  %s2 = inlined_call_operand.vmem [shape: f32[48,288], index: 2, kind: input, shape index: {}]
  %s3 = inlined_call_operand.vmem [shape: f32[1,288], index: 3, kind: input, shape index: {}]
  %s4 = inlined_call_operand.vmem [shape: f32[96,192], index: 4, kind: input, shape index: {}]
  %s5 = inlined_call_operand.vmem [shape: f32[192,288], index: 5, kind: input, shape index: {}]
  %s6 = inlined_call_operand.vmem [shape: f32[1,288], index: 6, kind: input, shape index: {}]
  %s7 = inlined_call_operand.vmem [shape: f32[2,8,96], index: 7, kind: output, shape index: {}]
  %s8 = sld [smem:[#allocation0]]
  $region61: #{stgcn_block_forward.2} parent=0
    _
  %s10 = ssub.s32 1, %s8
  %s11 = scalar_select 0, %s10, %s8
  loop: start=0, step=1, limit=4
  $region2: #{stgcn_block_forward.2} parent=0 // loop_pre_header
    _
  $region3: #{stgcn_block_forward.2} parent=0 // loop_header
    %s13 = sphi 0, %s17
    %p14 = scmp.ge.s32.totalorder %s13, 4
    %s23 = sphi 0, %s25
    %s26 = sphi 0, %s23
    %s27 = sphi 0, %s26
    %s43 = sphi 0, %s27
    %s47 = sphi 0, %s47
    %s49 = sphi 0, %s47
    %s50 = sphi 0, %s49
    %s64 = sphi 0, %s50
    %s68 = sphi 0, %s68
    %s70 = sphi 0, %s68
    %s71 = sphi 0, %s70
    %s85 = sphi 0, %s71
    %s89 = sphi 0, %s89
    %s91 = sphi 0, %s89
    %s92 = sphi 0, %s91
    %s106 = sphi 0, %s92
    %s110 = sphi 0, %s110
    %s112 = sphi 0, %s110
    %s113 = sphi 0, %s112
    %s127 = sphi 0, %s113
    %s131 = sphi 0, %s131
    %s133 = sphi 0, %s131
    %s134 = sphi 0, %s133
    %s148 = sphi 0, %s134
    %s152 = sphi 0, %s152
    %s154 = sphi 0, %s152
    %s155 = sphi 0, %s154
    %s169 = sphi 0, %s155
    %s175 = sphi 0, %s177
    %s178 = sphi 0, %s175
    %s179 = sphi 0, %s178
    %s195 = sphi 0, %s179
  $region4: #{stgcn_block_forward.2} parent=0 // loop_header_branch
    %16 = sbr.rel (%p14) target = $region8
  $region5: #{stgcn_block_forward.2} parent=0 // loop_body
    %s18 = ssub.s32 %s13, 1
    %s19 = ssub.s32 %s13, 2
    %s20 = sadd.s32 %s13, 1
    %s21 = ssub.s32 %s13, %s20
    %p22 = scmp.eq.s32.totalorder %s21, 0
    %s24 = sadd.s32 %s23, 1
    %s25 = scalar_select %p22, %s23, %s24
    %p28 = pneg %p22
    %p29 = scmp.eq.s32.totalorder %s13, 1
    %p30 = por %p28, %p29
    %p31 = scmp.ne.s32.totalorder %s23, %s26
    %p32 = scmp.eq.s32.totalorder %s13, 0
    %p33 = por %p31, %p32
    %p34 = scmp.ne.s32.totalorder %s23, %s26
    %p35 = scmp.eq.s32.totalorder %s18, 1
    %p36 = por %p34, %p35
    %p37 = scmp.ne.s32.totalorder %s26, %s27
    %p38 = scmp.eq.s32.totalorder %s18, 0
    %p39 = por %p37, %p38
    %p40 = scmp.ne.s32.totalorder %s26, %s27
    %p41 = scmp.eq.s32.totalorder %s19, 1
    %p42 = por %p40, %p41
    %p44 = scmp.ne.s32.totalorder %s27, %s43
    %p45 = scmp.eq.s32.totalorder %s19, 0
    %p46 = por %p44, %p45
    %s48 = sadd.s32 %s47, 1
    %p51 = scmp.eq.s32.totalorder %s13, 1
    %p52 = scmp.ne.s32.totalorder %s47, %s49
    %p53 = scmp.eq.s32.totalorder %s13, 0
    %p54 = por %p52, %p53
    %p55 = scmp.ne.s32.totalorder %s47, %s49
    %p56 = scmp.eq.s32.totalorder %s18, 1
    %p57 = por %p55, %p56
    %p58 = scmp.ne.s32.totalorder %s49, %s50
    %p59 = scmp.eq.s32.totalorder %s18, 0
    %p60 = por %p58, %p59
    %p61 = scmp.ne.s32.totalorder %s49, %s50
    %p62 = scmp.eq.s32.totalorder %s19, 1
    %p63 = por %p61, %p62
    %p65 = scmp.ne.s32.totalorder %s50, %s64
    %p66 = scmp.eq.s32.totalorder %s19, 0
    %p67 = por %p65, %p66
    %s69 = sadd.s32 %s68, 1
    %p72 = scmp.eq.s32.totalorder %s13, 1
    %p73 = scmp.ne.s32.totalorder %s68, %s70
    %p74 = scmp.eq.s32.totalorder %s13, 0
    %p75 = por %p73, %p74
    %p76 = scmp.ne.s32.totalorder %s68, %s70
    %p77 = scmp.eq.s32.totalorder %s18, 1
    %p78 = por %p76, %p77
    %p79 = scmp.ne.s32.totalorder %s70, %s71
    %p80 = scmp.eq.s32.totalorder %s18, 0
    %p81 = por %p79, %p80
    %p82 = scmp.ne.s32.totalorder %s70, %s71
    %p83 = scmp.eq.s32.totalorder %s19, 1
    %p84 = por %p82, %p83
    %p86 = scmp.ne.s32.totalorder %s71, %s85
    %p87 = scmp.eq.s32.totalorder %s19, 0
    %p88 = por %p86, %p87
    %s90 = sadd.s32 %s89, 1
    %p93 = scmp.eq.s32.totalorder %s13, 1
    %p94 = scmp.ne.s32.totalorder %s89, %s91
    %p95 = scmp.eq.s32.totalorder %s13, 0
    %p96 = por %p94, %p95
    %p97 = scmp.ne.s32.totalorder %s89, %s91
    %p98 = scmp.eq.s32.totalorder %s18, 1
    %p99 = por %p97, %p98
    %p100 = scmp.ne.s32.totalorder %s91, %s92
    %p101 = scmp.eq.s32.totalorder %s18, 0
    %p102 = por %p100, %p101
    %p103 = scmp.ne.s32.totalorder %s91, %s92
    %p104 = scmp.eq.s32.totalorder %s19, 1
    %p105 = por %p103, %p104
    %p107 = scmp.ne.s32.totalorder %s92, %s106
    %p108 = scmp.eq.s32.totalorder %s19, 0
    %p109 = por %p107, %p108
    %s111 = sadd.s32 %s110, 1
    %p114 = scmp.eq.s32.totalorder %s13, 1
    %p115 = scmp.ne.s32.totalorder %s110, %s112
    %p116 = scmp.eq.s32.totalorder %s13, 0
    %p117 = por %p115, %p116
    %p118 = scmp.ne.s32.totalorder %s110, %s112
    %p119 = scmp.eq.s32.totalorder %s18, 1
    %p120 = por %p118, %p119
    %p121 = scmp.ne.s32.totalorder %s112, %s113
    %p122 = scmp.eq.s32.totalorder %s18, 0
    %p123 = por %p121, %p122
    %p124 = scmp.ne.s32.totalorder %s112, %s113
    %p125 = scmp.eq.s32.totalorder %s19, 1
    %p126 = por %p124, %p125
    %p128 = scmp.ne.s32.totalorder %s113, %s127
    %p129 = scmp.eq.s32.totalorder %s19, 0
    %p130 = por %p128, %p129
    %s132 = sadd.s32 %s131, 1
    %p135 = scmp.eq.s32.totalorder %s13, 1
    %p136 = scmp.ne.s32.totalorder %s131, %s133
    %p137 = scmp.eq.s32.totalorder %s13, 0
    %p138 = por %p136, %p137
    %p139 = scmp.ne.s32.totalorder %s131, %s133
    %p140 = scmp.eq.s32.totalorder %s18, 1
    %p141 = por %p139, %p140
    %p142 = scmp.ne.s32.totalorder %s133, %s134
    %p143 = scmp.eq.s32.totalorder %s18, 0
    %p144 = por %p142, %p143
    %p145 = scmp.ne.s32.totalorder %s133, %s134
    %p146 = scmp.eq.s32.totalorder %s19, 1
    %p147 = por %p145, %p146
    %p149 = scmp.ne.s32.totalorder %s134, %s148
    %p150 = scmp.eq.s32.totalorder %s19, 0
    %p151 = por %p149, %p150
    %s153 = sadd.s32 %s152, 1
    %p156 = scmp.eq.s32.totalorder %s13, 1
    %p157 = scmp.ne.s32.totalorder %s152, %s154
    %p158 = scmp.eq.s32.totalorder %s13, 0
    %p159 = por %p157, %p158
    %p160 = scmp.ne.s32.totalorder %s152, %s154
    %p161 = scmp.eq.s32.totalorder %s18, 1
    %p162 = por %p160, %p161
    %p163 = scmp.ne.s32.totalorder %s154, %s155
    %p164 = scmp.eq.s32.totalorder %s18, 0
    %p165 = por %p163, %p164
    %p166 = scmp.ne.s32.totalorder %s154, %s155
    %p167 = scmp.eq.s32.totalorder %s19, 1
    %p168 = por %p166, %p167
    %p170 = scmp.ne.s32.totalorder %s155, %s169
    %p171 = scmp.eq.s32.totalorder %s19, 0
    %p172 = por %p170, %p171
    %s173 = ssub.s32 %s13, %s20
    %p174 = scmp.eq.s32.totalorder %s173, 0
    %s176 = sadd.s32 %s175, 1
    %s177 = scalar_select %p174, %s175, %s176
    %p180 = pneg %p174
    %p181 = scmp.eq.s32.totalorder %s13, 1
    %p182 = por %p180, %p181
    %p183 = scmp.ne.s32.totalorder %s175, %s178
    %p184 = scmp.eq.s32.totalorder %s13, 0
    %p185 = por %p183, %p184
    %p186 = scmp.ne.s32.totalorder %s175, %s178
    %p187 = scmp.eq.s32.totalorder %s18, 1
    %p188 = por %p186, %p187
    %p189 = scmp.ne.s32.totalorder %s178, %s179
    %p190 = scmp.eq.s32.totalorder %s18, 0
    %p191 = por %p189, %p190
    %p192 = scmp.ne.s32.totalorder %s178, %s179
    %p193 = scmp.eq.s32.totalorder %s19, 1
    %p194 = por %p192, %p193
    %p196 = scmp.ne.s32.totalorder %s179, %s195
    %p197 = scmp.eq.s32.totalorder %s19, 0
    %p198 = por %p196, %p197
    %p199 = scmp.le.s32.totalorder 1, %s13
    %p200 = scmp.lt.s32.totalorder %s13, 3
    %p201 = pnand %p199, %p200
    %p202 = pneg %p201
    // Predicated region
    $region9: #{stgcn_block_forward.2} parent=5 // pred_check
      _
    $region10: #{stgcn_block_forward.2} parent=5 // pred_check_branch
      %204 = sbr.rel (%p201) target = $region12
    $region11: #{stgcn_block_forward.2} parent=5 // pred_region
      %s205 = ssub.s32 %s13, 1
      // Predicated region
      $region13: #{stgcn_block_forward.2} parent=11 // pred_check
        %p206 = pneg %p60
      $region14: #{stgcn_block_forward.2} parent=11 // pred_check_branch
        %208 = sbr.rel (%p206) target = $region16
      $region15: #{stgcn_block_forward.2} parent=11 // pred_region
        _
      $region16: #{stgcn_block_forward.2} parent=11 // pred_fallthru
        _
      // Predicated region
      $region17: #{stgcn_block_forward.2} parent=11 // pred_check
        %p209 = pneg %p81
      $region18: #{stgcn_block_forward.2} parent=11 // pred_check_branch
        %211 = sbr.rel (%p209) target = $region20
      $region19: #{stgcn_block_forward.2} parent=11 // pred_region
        _
      $region20: #{stgcn_block_forward.2} parent=11 // pred_fallthru
        _
      // Predicated region
      $region21: #{stgcn_block_forward.2} parent=11 // pred_check
        %p212 = pneg %p102
      $region22: #{stgcn_block_forward.2} parent=11 // pred_check_branch
        %214 = sbr.rel (%p212) target = $region24
      $region23: #{stgcn_block_forward.2} parent=11 // pred_region
        _
      $region24: #{stgcn_block_forward.2} parent=11 // pred_fallthru
        _
      // Predicated region
      $region25: #{stgcn_block_forward.2} parent=11 // pred_check
        %p215 = pneg %p123
      $region26: #{stgcn_block_forward.2} parent=11 // pred_check_branch
        %217 = sbr.rel (%p215) target = $region28
      $region27: #{stgcn_block_forward.2} parent=11 // pred_region
        _
      $region28: #{stgcn_block_forward.2} parent=11 // pred_fallthru
        _
      // Predicated region
      $region29: #{stgcn_block_forward.2} parent=11 // pred_check
        %p218 = pneg %p144
      $region30: #{stgcn_block_forward.2} parent=11 // pred_check_branch
        %220 = sbr.rel (%p218) target = $region32
      $region31: #{stgcn_block_forward.2} parent=11 // pred_region
        _
      $region32: #{stgcn_block_forward.2} parent=11 // pred_fallthru
        _
      // Predicated region
      $region33: #{stgcn_block_forward.2} parent=11 // pred_check
        %p221 = pneg %p165
      $region34: #{stgcn_block_forward.2} parent=11 // pred_check_branch
        %223 = sbr.rel (%p221) target = $region36
      $region35: #{stgcn_block_forward.2} parent=11 // pred_region
        _
      $region36: #{stgcn_block_forward.2} parent=11 // pred_fallthru
        _
    $region12: #{stgcn_block_forward.2} parent=5 // pred_fallthru
      _
    %p224 = scmp.lt.s32.totalorder %s13, 2
    // Predicated region
    $region37: #{stgcn_block_forward.2} parent=5 // pred_check
      %p225 = pneg %p224
    $region38: #{stgcn_block_forward.2} parent=5 // pred_check_branch
      %227 = sbr.rel (%p225) target = $region40
    $region39: #{stgcn_block_forward.2} parent=5 // pred_region
      // Predicated region
      $region41: #{stgcn_block_forward.2} parent=39 // pred_check
        %p228 = pneg %p33
      $region42: #{stgcn_block_forward.2} parent=39 // pred_check_branch
        %230 = sbr.rel (%p228) target = $region44
      $region43: #{stgcn_block_forward.2} parent=39 // pred_region
        %p231 = scmp.lt.s32.totalorder %s13, 1
        %s232 = scalar_select %p231, %s13, 1
        %s233 = smul.addr %s232, 8
        %s234 = scalar_lea.vmem %s0, %s233
      $region44: #{stgcn_block_forward.2} parent=39 // pred_fallthru
        _
    $region40: #{stgcn_block_forward.2} parent=5 // pred_fallthru
      _
    %p235 = scmp.le.s32.totalorder 1, %s13
    %p236 = scmp.lt.s32.totalorder %s13, 3
    %p237 = pnand %p235, %p236
    %p238 = pneg %p237
    // Predicated region
    $region45: #{stgcn_block_forward.2} parent=5 // pred_check
      _
    $region46: #{stgcn_block_forward.2} parent=5 // pred_check_branch
      %240 = sbr.rel (%p237) target = $region48
    $region47: #{stgcn_block_forward.2} parent=5 // pred_region
      %s241 = ssub.s32 %s13, 1
      %p242 = scmp.lt.s32.totalorder %s18, 1
      %s243 = scalar_select %p242, %s18, 1
      %s244 = smul.addr %s243, 8
      %s245 = scalar_lea.vmem %s0, %s244
      %p246 = pneg %p39
      %p247 = pneg %p36
      %p248 = pneg %p60
      %p249 = pneg %p57
      %p250 = pneg %p81
      %p251 = pneg %p78
      %p252 = pneg %p102
      %p253 = pneg %p99
      %p254 = pneg %p123
      %p255 = pneg %p120
      %p256 = pneg %p144
      %p257 = pneg %p141
      %p258 = pneg %p165
      %p259 = pneg %p162
      %p260 = pneg %p191
      %p261 = pneg %p188
      %p262 = scmp.lt.s32.totalorder %s18, 1
      %s263 = scalar_select %p262, %s18, 1
      %s264 = smul.addr %s263, 8
      %s265 = scalar_lea.vmem %s7, %s264
      %p266 = scmp.lt.s32.totalorder %s18, 1
      %s267 = scalar_select %p266, %s18, 1
      %s268 = smul.addr %s267, 8
      %s269 = scalar_lea.vmem %s0, %s268
      %p270 = scmp.lt.s32.totalorder %s18, 1
      %s271 = scalar_select %p270, %s18, 1
      %s272 = smul.addr %s271, 8
      %s273 = scalar_lea.vmem %s7, %s272
      %v274 = vld [vmem:[%s269] sm:$0xff]
      %v275 = vld [vmem:[%s2] sm:$0xff]
      %v276 = vld [vmem:[%s2 + $0x8] sm:$0xff]
      %v277 = vld [vmem:[%s2 + $0x10] sm:$0xff]
      %v278 = vld [vmem:[%s2 + $0x18] sm:$0xff]
      %v279 = vld [vmem:[%s2 + $0x20] sm:$0xff]
      %v280 = vld [vmem:[%s2 + $0x28] sm:$0xff]
      %v281 = vld [vmem:[%s2 + $0x30] sm:$0xff]
      %v282 = vld [vmem:[%s2 + $0x38] sm:$0xff]
      %v283 = vld [vmem:[%s2 + $0x40] sm:$0xff]
      %v284 = vld [vmem:[%s2 + $0x48] sm:$0xff]
      %v285 = vld [vmem:[%s2 + $0x50] sm:$0xff]
      %v286 = vld [vmem:[%s2 + $0x58] sm:$0xff]
      %v287 = vld [vmem:[%s2 + $0x60] sm:$0xff]
      %v288 = vld [vmem:[%s2 + $0x68] sm:$0xff]
      %v289 = vld [vmem:[%s2 + $0x70] sm:$0xff]
      %v290 = vld [vmem:[%s2 + $0x78] sm:$0xff]
      %v291 = vld [vmem:[%s2 + $0x80] sm:$0xff]
      %v292 = vld [vmem:[%s2 + $0x88] sm:$0xff]
      %v293 = vld [vmem:[%s3] sm:$0x7]
      %v295 = vlaneseq
      %v296 = vshrl.u32 %v295, 7
      %v297 = vsub.s32 0, %v296
      %v298 = vrot.slane %v293, %v297
      %v299 = vlaneseq
      %v300 = vshrl.u32 %v299, 7
      %v301 = vsub.s32 1, %v300
      %v302 = vrot.slane %v293, %v301
      %v303 = vlaneseq
      %v304 = vshrl.u32 %v303, 7
      %v305 = vsub.s32 2, %v304
      %v306 = vrot.slane %v293, %v305
      %vm310 = vcmask 392192
      %v312 = vsel %vm310, %v274, 0
      %314 = vmatprep.subr.mxu0 %v276
      %315 = vmatpush1.msra.mxu0 %v275
      %316 = vmatprep.subr.mxu0 %v279
      %317 = vmatpush1.msra.mxu0 %v278
      %318 = vmatprep.subr.mxu0 %v282
      %319 = vmatpush1.msra.mxu0 %v281
      %320 = vmatprep.subr.mxu0 %v285
      %321 = vmatpush1.msra.mxu0 %v284
      %322 = vmatprep.subr.mxu0 %v288
      %323 = vmatpush1.msra.mxu0 %v287
      %324 = vmatprep.subr.mxu0 %v291
      %325 = vmatpush1.msra.mxu0 %v290
      %326 = vmatprep.subr.mxu0 0.0
      %327 = vmatpush1.msra.mxu0 0.0
      %328 = vmatprep.subr.mxu0 0.0
      %329 = vmatpush1.msra.mxu0 0.0
      %330 = vmatprep.subr.mxu0 0.0
      %331 = vmatpush1.msra.mxu0 0.0
      %332 = vmatprep.subr.mxu0 0.0
      %333 = vmatpush1.msra.mxu0 0.0
      %334 = vmatprep.subr.mxu0 0.0
      %335 = vmatpush1.msra.mxu0 0.0
      %336 = vmatprep.subr.mxu0 0.0
      %337 = vmatpush1.msra.mxu0 0.0
      %338 = vmatprep.subr.mxu0 0.0
      %339 = vmatpush1.msra.mxu0 0.0
      %340 = vmatprep.subr.mxu0 0.0
      %341 = vmatpush1.msra.mxu0 0.0
      %342 = vmatprep.subr.mxu0 0.0
      %343 = vmatpush1.msra.mxu0 0.0
      %344 = vmatprep.subr.mxu0 0.0
      %345 = vmatpush1.msra.mxu0 0.0
      %346 = vmatprep.subr.mxu0 0.0
      %347 = vmatpush1.msra.mxu0 0.0
      %348 = vmatprep.subr.mxu0 0.0
      %349 = vmatpush1.msra.mxu0 0.0
      %350 = vmatprep.subr.mxu0 0.0
      %351 = vmatpush1.msra.mxu0 0.0
      %352 = vmatprep.subr.mxu0 0.0
      %353 = vmatpush1.msra.mxu0 0.0
      %354 = vmatprep.subr.mxu0 0.0
      %355 = vmatpush1.msra.mxu0 0.0
      %356 = vmatprep.subr.mxu0 0.0
      %357 = vmatpush1.msra.mxu0 0.0
      %358 = vmatprep.subr.mxu0 0.0
      %359 = vmatpush1.msra.mxu0 0.0
      %360 = vmatprep.subr.mxu0 0.0
      %361 = vmatpush1.msra.mxu0 0.0
      %362 = vmatprep.subr.mxu0 0.0
      %363 = vmatpush1.msra.mxu0 0.0
      %364 = vmatprep.subr.mxu0 0.0
      %365 = vmatpush1.msra.mxu0 0.0
      %366 = vmatprep.subr.mxu0 0.0
      %367 = vmatpush1.msra.mxu0 0.0
      %368 = vmatprep.subr.mxu0 0.0
      %369 = vmatpush1.msra.mxu0 0.0
      %370 = vmatprep.subr.mxu0 0.0
      %371 = vmatpush1.msra.mxu0 0.0
      %372 = vmatprep.subr.mxu0 0.0
      %373 = vmatpush1.msra.mxu0 0.0
      %374 = vmatprep.subr.mxu0 0.0
      %375 = vmatpush1.msra.mxu0 0.0
      %376 = vmatprep.subr.mxu0 0.0
      %377 = vmatpush1.msra.mxu0 0.0
      %378 = vmatprep.mubr.f32.mxu0 0.0
      %379 = vmatmul.mubr.f32.gmra.mrb[0].mxu0 %v312
      %v380 = vpop.f32.mrb[0].mxu0
      %v381 = vadd.f32 %v298, %v380
      %v382 = vpop.f32.mrb[0].mxu0
      %v383 = vadd.f32 %v302, %v382
      %384 = vdwg.mxu0
      %385 = vmatprep.subr.mxu0 0.0
      %386 = vmatpush1.msra.mxu0 %v277
      %387 = vmatprep.subr.mxu0 0.0
      %388 = vmatpush1.msra.mxu0 %v280
      %389 = vmatprep.subr.mxu0 0.0
      %390 = vmatpush1.msra.mxu0 %v283
      %391 = vmatprep.subr.mxu0 0.0
      %392 = vmatpush1.msra.mxu0 %v286
      %393 = vmatprep.subr.mxu0 0.0
      %394 = vmatpush1.msra.mxu0 %v289
      %395 = vmatprep.subr.mxu0 0.0
      %396 = vmatpush1.msra.mxu0 %v292
      %397 = vmatprep.subr.mxu0 0.0
      %398 = vmatpush1.msra.mxu0 0.0
      %399 = vmatprep.subr.mxu0 0.0
      %400 = vmatpush1.msra.mxu0 0.0
      %401 = vmatprep.subr.mxu0 0.0
      %402 = vmatpush1.msra.mxu0 0.0
      %403 = vmatprep.subr.mxu0 0.0
      %404 = vmatpush1.msra.mxu0 0.0
      %405 = vmatprep.subr.mxu0 0.0
      %406 = vmatpush1.msra.mxu0 0.0
      %407 = vmatprep.subr.mxu0 0.0
      %408 = vmatpush1.msra.mxu0 0.0
      %409 = vmatprep.subr.mxu0 0.0
      %410 = vmatpush1.msra.mxu0 0.0
      %411 = vmatprep.subr.mxu0 0.0
      %412 = vmatpush1.msra.mxu0 0.0
      %413 = vmatprep.subr.mxu0 0.0
      %414 = vmatpush1.msra.mxu0 0.0
      %415 = vmatprep.subr.mxu0 0.0
      %416 = vmatpush1.msra.mxu0 0.0
      %417 = vmatprep.subr.mxu0 0.0
      %418 = vmatpush1.msra.mxu0 0.0
      %419 = vmatprep.subr.mxu0 0.0
      %420 = vmatpush1.msra.mxu0 0.0
      %421 = vmatprep.subr.mxu0 0.0
      %422 = vmatpush1.msra.mxu0 0.0
      %423 = vmatprep.subr.mxu0 0.0
      %424 = vmatpush1.msra.mxu0 0.0
      %425 = vmatprep.subr.mxu0 0.0
      %426 = vmatpush1.msra.mxu0 0.0
      %427 = vmatprep.subr.mxu0 0.0
      %428 = vmatpush1.msra.mxu0 0.0
      %429 = vmatprep.subr.mxu0 0.0
      %430 = vmatpush1.msra.mxu0 0.0
      %431 = vmatprep.subr.mxu0 0.0
      %432 = vmatpush1.msra.mxu0 0.0
      %433 = vmatprep.subr.mxu0 0.0
      %434 = vmatpush1.msra.mxu0 0.0
      %435 = vmatprep.subr.mxu0 0.0
      %436 = vmatpush1.msra.mxu0 0.0
      %437 = vmatprep.subr.mxu0 0.0
      %438 = vmatpush1.msra.mxu0 0.0
      %439 = vmatprep.subr.mxu0 0.0
      %440 = vmatpush1.msra.mxu0 0.0
      %441 = vmatprep.subr.mxu0 0.0
      %442 = vmatpush1.msra.mxu0 0.0
      %443 = vmatprep.subr.mxu0 0.0
      %444 = vmatpush1.msra.mxu0 0.0
      %445 = vmatprep.subr.mxu0 0.0
      %446 = vmatpush1.msra.mxu0 0.0
      %447 = vmatprep.subr.mxu0 0.0
      %448 = vmatpush1.msra.mxu0 0.0
      %449 = vmatprep.mubr.f32.mxu0 0.0
      %450 = vmatmul.mubr.f32.gmra.mrb[0].mxu0 %v312
      %v451 = vpop.f32.mrb[0].mxu0
      %v452 = vadd.f32 %v306, %v451
      %v453 = vpop.f32.mrb[0].mxu0
      %454 = vdwg.mxu0
      %v455 = vxor.u32 %v381, 2147483648
      %v456 = vxor.u32 %v383, 2147483648
      %v457 = vmul.f32 %v455, 1.442695
      %v458 = vpow.pop %v457
      %v459 = vmul.f32 %v456, 1.442695
      %v460 = vpow.pop %v459
      %v461 = vadd.f32 %v458, 1.0
      %v462 = vadd.f32 %v460, 1.0
      %v463 = vrcp.pop %v461
      %v464 = vmul.f32 1.0, %v463
      %v465 = vrcp.pop %v462
      %v466 = vmul.f32 1.0, %v465
      %469 = vrot.lane.b32.xlu0 %v464, 32
      %v470 = vpop.permute.xlu0 %469
      %471 = vrot.lane.b32.xlu0 %v466, 32
      %v472 = vpop.permute.xlu0 %471
      %vm473 = vcmask 261120
      %v474 = vsel %vm473, %v470, %v472
      %v476 = vadd.f32 %v381, %v474
      %479 = vrot.lane.b32.xlu0 %v383, 64
      %v480 = vpop.permute.xlu0 %479
      %481 = vrot.lane.b32.xlu0 %v452, 64
      %v482 = vpop.permute.xlu0 %481
      %vm483 = vcmask 523264
      %v484 = vsel %vm483, %v480, %v482
      %v486 = vadd.f32 %v476, %v484
      %v487 = vmax.f32 %v486, 0.0
      %v488 = vld [vmem:[%s4] sm:$0xff]
      %v489 = vld [vmem:[%s4 + $0x8] sm:$0xff]
      %v490 = vld [vmem:[%s4 + $0x10] sm:$0xff]
      %v491 = vld [vmem:[%s4 + $0x18] sm:$0xff]
      %v492 = vld [vmem:[%s4 + $0x20] sm:$0xff]
      %v493 = vld [vmem:[%s4 + $0x28] sm:$0xff]
      %v494 = vld [vmem:[%s4 + $0x30] sm:$0xff]
      %v495 = vld [vmem:[%s4 + $0x38] sm:$0xff]
      %v496 = vld [vmem:[%s4 + $0x40] sm:$0xff]
      %v497 = vld [vmem:[%s4 + $0x48] sm:$0xff]
      %v498 = vld [vmem:[%s4 + $0x50] sm:$0xff]
      %v499 = vld [vmem:[%s4 + $0x58] sm:$0xff]
      %v500 = vld [vmem:[%s4 + $0x60] sm:$0xff]
      %v501 = vld [vmem:[%s4 + $0x68] sm:$0xff]
      %v502 = vld [vmem:[%s4 + $0x70] sm:$0xff]
      %v503 = vld [vmem:[%s4 + $0x78] sm:$0xff]
      %v504 = vld [vmem:[%s4 + $0x80] sm:$0xff]
      %v505 = vld [vmem:[%s4 + $0x88] sm:$0xff]
      %v506 = vld [vmem:[%s4 + $0x90] sm:$0xff]
      %v507 = vld [vmem:[%s4 + $0x98] sm:$0xff]
      %v508 = vld [vmem:[%s4 + $0xa0] sm:$0xff]
      %v509 = vld [vmem:[%s4 + $0xa8] sm:$0xff]
      %v510 = vld [vmem:[%s4 + $0xb0] sm:$0xff]
      %v511 = vld [vmem:[%s4 + $0xb8] sm:$0xff]
      %vm512 = vcmask 785408
      %v514 = vsel %vm512, %v487, 0
      %516 = vmatprep.subr.mxu0 %v489
      %517 = vmatpush1.msra.mxu0 %v488
      %518 = vmatprep.subr.mxu0 %v491
      %519 = vmatpush1.msra.mxu0 %v490
      %520 = vmatprep.subr.mxu0 %v493
      %521 = vmatpush1.msra.mxu0 %v492
      %522 = vmatprep.subr.mxu0 %v495
      %523 = vmatpush1.msra.mxu0 %v494
      %524 = vmatprep.subr.mxu0 %v497
      %525 = vmatpush1.msra.mxu0 %v496
      %526 = vmatprep.subr.mxu0 %v499
      %527 = vmatpush1.msra.mxu0 %v498
      %528 = vmatprep.subr.mxu0 %v501
      %529 = vmatpush1.msra.mxu0 %v500
      %530 = vmatprep.subr.mxu0 %v503
      %531 = vmatpush1.msra.mxu0 %v502
      %532 = vmatprep.subr.mxu0 %v505
      %533 = vmatpush1.msra.mxu0 %v504
      %534 = vmatprep.subr.mxu0 %v507
      %535 = vmatpush1.msra.mxu0 %v506
      %536 = vmatprep.subr.mxu0 %v509
      %537 = vmatpush1.msra.mxu0 %v508
      %538 = vmatprep.subr.mxu0 %v511
      %539 = vmatpush1.msra.mxu0 %v510
      %540 = vmatprep.subr.mxu0 0.0
      %541 = vmatpush1.msra.mxu0 0.0
      %542 = vmatprep.subr.mxu0 0.0
      %543 = vmatpush1.msra.mxu0 0.0
      %544 = vmatprep.subr.mxu0 0.0
      %545 = vmatpush1.msra.mxu0 0.0
      %546 = vmatprep.subr.mxu0 0.0
      %547 = vmatpush1.msra.mxu0 0.0
      %548 = vmatprep.subr.mxu0 0.0
      %549 = vmatpush1.msra.mxu0 0.0
      %550 = vmatprep.subr.mxu0 0.0
      %551 = vmatpush1.msra.mxu0 0.0
      %552 = vmatprep.subr.mxu0 0.0
      %553 = vmatpush1.msra.mxu0 0.0
      %554 = vmatprep.subr.mxu0 0.0
      %555 = vmatpush1.msra.mxu0 0.0
      %556 = vmatprep.subr.mxu0 0.0
      %557 = vmatpush1.msra.mxu0 0.0
      %558 = vmatprep.subr.mxu0 0.0
      %559 = vmatpush1.msra.mxu0 0.0
      %560 = vmatprep.subr.mxu0 0.0
      %561 = vmatpush1.msra.mxu0 0.0
      %562 = vmatprep.subr.mxu0 0.0
      %563 = vmatpush1.msra.mxu0 0.0
      %564 = vmatprep.subr.mxu0 0.0
      %565 = vmatpush1.msra.mxu0 0.0
      %566 = vmatprep.subr.mxu0 0.0
      %567 = vmatpush1.msra.mxu0 0.0
      %568 = vmatprep.subr.mxu0 0.0
      %569 = vmatpush1.msra.mxu0 0.0
      %570 = vmatprep.subr.mxu0 0.0
      %571 = vmatpush1.msra.mxu0 0.0
      %572 = vmatprep.subr.mxu0 0.0
      %573 = vmatpush1.msra.mxu0 0.0
      %574 = vmatprep.subr.mxu0 0.0
      %575 = vmatpush1.msra.mxu0 0.0
      %576 = vmatprep.subr.mxu0 0.0
      %577 = vmatpush1.msra.mxu0 0.0
      %578 = vmatprep.subr.mxu0 0.0
      %579 = vmatpush1.msra.mxu0 0.0
      %580 = vmatprep.mubr.f32.mxu0 0.0
      %581 = vmatmul.mubr.f32.gmra.mrb[0].mxu0 %v514
      %v582 = vpop.f32.mrb[0].mxu0
      %v583 = vadd.f32 0.0, %v582
      %v584 = vpop.f32.mrb[0].mxu0
      %v585 = vadd.f32 0.0, %v584
      %586 = vdwg.mxu0
      %v587 = vld [vmem:[%s1] sm:$0xff]
      %vm588 = vcmask 64512
      %v590 = vsel %vm588, %v587, 0
      %592 = vmatprep.subr.mxu0 %v585
      %593 = vmatpush1.msra.mxu0 %v583
      %594 = vmatprep.subr.mxu0 0.0
      %595 = vmatpush1.msra.mxu0 0.0
      %596 = vmatprep.subr.mxu0 0.0
      %597 = vmatpush1.msra.mxu0 0.0
      %598 = vmatprep.subr.mxu0 0.0
      %599 = vmatpush1.msra.mxu0 0.0
      %600 = vmatprep.subr.mxu0 0.0
      %601 = vmatpush1.msra.mxu0 0.0
      %602 = vmatprep.subr.mxu0 0.0
      %603 = vmatpush1.msra.mxu0 0.0
      %604 = vmatprep.subr.mxu0 0.0
      %605 = vmatpush1.msra.mxu0 0.0
      %606 = vmatprep.subr.mxu0 0.0
      %607 = vmatpush1.msra.mxu0 0.0
      %608 = vmatprep.subr.mxu0 0.0
      %609 = vmatpush1.msra.mxu0 0.0
      %610 = vmatprep.subr.mxu0 0.0
      %611 = vmatpush1.msra.mxu0 0.0
      %612 = vmatprep.subr.mxu0 0.0
      %613 = vmatpush1.msra.mxu0 0.0
      %614 = vmatprep.subr.mxu0 0.0
      %615 = vmatpush1.msra.mxu0 0.0
      %616 = vmatprep.subr.mxu0 0.0
      %617 = vmatpush1.msra.mxu0 0.0
      %618 = vmatprep.subr.mxu0 0.0
      %619 = vmatpush1.msra.mxu0 0.0
      %620 = vmatprep.subr.mxu0 0.0
      %621 = vmatpush1.msra.mxu0 0.0
      %622 = vmatprep.subr.mxu0 0.0
      %623 = vmatpush1.msra.mxu0 0.0
      %624 = vmatprep.subr.mxu0 0.0
      %625 = vmatpush1.msra.mxu0 0.0
      %626 = vmatprep.subr.mxu0 0.0
      %627 = vmatpush1.msra.mxu0 0.0
      %628 = vmatprep.subr.mxu0 0.0
      %629 = vmatpush1.msra.mxu0 0.0
      %630 = vmatprep.subr.mxu0 0.0
      %631 = vmatpush1.msra.mxu0 0.0
      %632 = vmatprep.subr.mxu0 0.0
      %633 = vmatpush1.msra.mxu0 0.0
      %634 = vmatprep.subr.mxu0 0.0
      %635 = vmatpush1.msra.mxu0 0.0
      %636 = vmatprep.subr.mxu0 0.0
      %637 = vmatpush1.msra.mxu0 0.0
      %638 = vmatprep.subr.mxu0 0.0
      %639 = vmatpush1.msra.mxu0 0.0
      %640 = vmatprep.subr.mxu0 0.0
      %641 = vmatpush1.msra.mxu0 0.0
      %642 = vmatprep.subr.mxu0 0.0
      %643 = vmatpush1.msra.mxu0 0.0
      %644 = vmatprep.subr.mxu0 0.0
      %645 = vmatpush1.msra.mxu0 0.0
      %646 = vmatprep.subr.mxu0 0.0
      %647 = vmatpush1.msra.mxu0 0.0
      %648 = vmatprep.subr.mxu0 0.0
      %649 = vmatpush1.msra.mxu0 0.0
      %650 = vmatprep.subr.mxu0 0.0
      %651 = vmatpush1.msra.mxu0 0.0
      %652 = vmatprep.subr.mxu0 0.0
      %653 = vmatpush1.msra.mxu0 0.0
      %654 = vmatprep.subr.mxu0 0.0
      %655 = vmatpush1.msra.mxu0 0.0
      %656 = vmatprep.mubr.f32.mxu0 0.0
      %657 = vmatmul.mubr.f32.gmra.mrb[0].mxu0 %v590
      %v658 = vpop.f32.mrb[0].mxu0
      %v659 = vadd.f32 0.0, %v658
      %v660 = vpop.f32.mrb[0].mxu0
      %v661 = vadd.f32 0.0, %v660
      %662 = vdwg.mxu0
      %v663 = vmax.f32 %v659, 0.0
      %v664 = vmax.f32 %v661, 0.0
      %v665 = vld [vmem:[%s5] sm:$0xff]
      %v666 = vld [vmem:[%s5 + $0x8] sm:$0xff]
      %v667 = vld [vmem:[%s5 + $0x10] sm:$0xff]
      %v668 = vld [vmem:[%s5 + $0x18] sm:$0xff]
      %v669 = vld [vmem:[%s5 + $0x20] sm:$0xff]
      %v670 = vld [vmem:[%s5 + $0x28] sm:$0xff]
      %v671 = vld [vmem:[%s5 + $0x30] sm:$0xff]
      %v672 = vld [vmem:[%s5 + $0x38] sm:$0xff]
      %v673 = vld [vmem:[%s5 + $0x40] sm:$0xff]
      %v674 = vld [vmem:[%s5 + $0x48] sm:$0xff]
      %v675 = vld [vmem:[%s5 + $0x50] sm:$0xff]
      %v676 = vld [vmem:[%s5 + $0x58] sm:$0xff]
      %v677 = vld [vmem:[%s5 + $0x60] sm:$0xff]
      %v678 = vld [vmem:[%s5 + $0x68] sm:$0xff]
      %v679 = vld [vmem:[%s5 + $0x70] sm:$0xff]
      %v680 = vld [vmem:[%s5 + $0x78] sm:$0xff]
      %v681 = vld [vmem:[%s5 + $0x80] sm:$0xff]
      %v682 = vld [vmem:[%s5 + $0x88] sm:$0xff]
      %v683 = vld [vmem:[%s5 + $0x90] sm:$0xff]
      %v684 = vld [vmem:[%s5 + $0x98] sm:$0xff]
      %v685 = vld [vmem:[%s5 + $0xa0] sm:$0xff]
      %v686 = vld [vmem:[%s5 + $0xa8] sm:$0xff]
      %v687 = vld [vmem:[%s5 + $0xb0] sm:$0xff]
      %v688 = vld [vmem:[%s5 + $0xb8] sm:$0xff]
      %v689 = vld [vmem:[%s5 + $0xc0] sm:$0xff]
      %v690 = vld [vmem:[%s5 + $0xc8] sm:$0xff]
      %v691 = vld [vmem:[%s5 + $0xd0] sm:$0xff]
      %v692 = vld [vmem:[%s5 + $0xd8] sm:$0xff]
      %v693 = vld [vmem:[%s5 + $0xe0] sm:$0xff]
      %v694 = vld [vmem:[%s5 + $0xe8] sm:$0xff]
      %v695 = vld [vmem:[%s5 + $0xf0] sm:$0xff]
      %v696 = vld [vmem:[%s5 + $0xf8] sm:$0xff]
      %v697 = vld [vmem:[%s5 + $0x100] sm:$0xff]
      %v698 = vld [vmem:[%s5 + $0x108] sm:$0xff]
      %v699 = vld [vmem:[%s5 + $0x110] sm:$0xff]
      %v700 = vld [vmem:[%s5 + $0x118] sm:$0xff]
      %v701 = vld [vmem:[%s5 + $0x120] sm:$0xff]
      %v702 = vld [vmem:[%s5 + $0x128] sm:$0xff]
      %v703 = vld [vmem:[%s5 + $0x130] sm:$0xff]
      %v704 = vld [vmem:[%s5 + $0x138] sm:$0xff]
      %v705 = vld [vmem:[%s5 + $0x140] sm:$0xff]
      %v706 = vld [vmem:[%s5 + $0x148] sm:$0xff]
      %v707 = vld [vmem:[%s5 + $0x150] sm:$0xff]
      %v708 = vld [vmem:[%s5 + $0x158] sm:$0xff]
      %v709 = vld [vmem:[%s5 + $0x160] sm:$0xff]
      %v710 = vld [vmem:[%s5 + $0x168] sm:$0xff]
      %v711 = vld [vmem:[%s5 + $0x170] sm:$0xff]
      %v712 = vld [vmem:[%s5 + $0x178] sm:$0xff]
      %v713 = vld [vmem:[%s5 + $0x180] sm:$0xff]
      %v714 = vld [vmem:[%s5 + $0x188] sm:$0xff]
      %v715 = vld [vmem:[%s5 + $0x190] sm:$0xff]
      %v716 = vld [vmem:[%s5 + $0x198] sm:$0xff]
      %v717 = vld [vmem:[%s5 + $0x1a0] sm:$0xff]
      %v718 = vld [vmem:[%s5 + $0x1a8] sm:$0xff]
      %v719 = vld [vmem:[%s5 + $0x1b0] sm:$0xff]
      %v720 = vld [vmem:[%s5 + $0x1b8] sm:$0xff]
      %v721 = vld [vmem:[%s5 + $0x1c0] sm:$0xff]
      %v722 = vld [vmem:[%s5 + $0x1c8] sm:$0xff]
      %v723 = vld [vmem:[%s5 + $0x1d0] sm:$0xff]
      %v724 = vld [vmem:[%s5 + $0x1d8] sm:$0xff]
      %v725 = vld [vmem:[%s5 + $0x1e0] sm:$0xff]
      %v726 = vld [vmem:[%s5 + $0x1e8] sm:$0xff]
      %v727 = vld [vmem:[%s5 + $0x1f0] sm:$0xff]
      %v728 = vld [vmem:[%s5 + $0x1f8] sm:$0xff]
      %v729 = vld [vmem:[%s5 + $0x200] sm:$0xff]
      %v730 = vld [vmem:[%s5 + $0x208] sm:$0xff]
      %v731 = vld [vmem:[%s5 + $0x210] sm:$0xff]
      %v732 = vld [vmem:[%s5 + $0x218] sm:$0xff]
      %v733 = vld [vmem:[%s5 + $0x220] sm:$0xff]
      %v734 = vld [vmem:[%s5 + $0x228] sm:$0xff]
      %v735 = vld [vmem:[%s5 + $0x230] sm:$0xff]
      %v736 = vld [vmem:[%s5 + $0x238] sm:$0xff]
      %v737 = vld [vmem:[%s6] sm:$0x7]
      %v739 = vlaneseq
      %v740 = vshrl.u32 %v739, 7
      %v741 = vsub.s32 0, %v740
      %v742 = vrot.slane %v737, %v741
      %v743 = vlaneseq
      %v744 = vshrl.u32 %v743, 7
      %v745 = vsub.s32 1, %v744
      %v746 = vrot.slane %v737, %v745
      %v747 = vlaneseq
      %v748 = vshrl.u32 %v747, 7
      %v749 = vsub.s32 2, %v748
      %v750 = vrot.slane %v737, %v749
      %v755 = vsel %vm483, %v664, 0
      %757 = vmatprep.subr.mxu0 %v666
      %758 = vmatpush1.msra.mxu0 %v665
      %759 = vmatprep.subr.mxu0 %v669
      %760 = vmatpush1.msra.mxu0 %v668
      %761 = vmatprep.subr.mxu0 %v672
      %762 = vmatpush1.msra.mxu0 %v671
      %763 = vmatprep.subr.mxu0 %v675
      %764 = vmatpush1.msra.mxu0 %v674
      %765 = vmatprep.subr.mxu0 %v678
      %766 = vmatpush1.msra.mxu0 %v677
      %767 = vmatprep.subr.mxu0 %v681
      %768 = vmatpush1.msra.mxu0 %v680
      %769 = vmatprep.subr.mxu0 %v684
      %770 = vmatpush1.msra.mxu0 %v683
      %771 = vmatprep.subr.mxu0 %v687
      %772 = vmatpush1.msra.mxu0 %v686
      %773 = vmatprep.subr.mxu0 %v690
      %774 = vmatpush1.msra.mxu0 %v689
      %775 = vmatprep.subr.mxu0 %v693
      %776 = vmatpush1.msra.mxu0 %v692
      %777 = vmatprep.subr.mxu0 %v696
      %778 = vmatpush1.msra.mxu0 %v695
      %779 = vmatprep.subr.mxu0 %v699
      %780 = vmatpush1.msra.mxu0 %v698
      %781 = vmatprep.subr.mxu0 %v702
      %782 = vmatpush1.msra.mxu0 %v701
      %783 = vmatprep.subr.mxu0 %v705
      %784 = vmatpush1.msra.mxu0 %v704
      %785 = vmatprep.subr.mxu0 %v708
      %786 = vmatpush1.msra.mxu0 %v707
      %787 = vmatprep.subr.mxu0 %v711
      %788 = vmatpush1.msra.mxu0 %v710
      %789 = vmatprep.subr.mxu0 %v714
      %790 = vmatpush1.msra.mxu0 %v713
      %791 = vmatprep.subr.mxu0 %v717
      %792 = vmatpush1.msra.mxu0 %v716
      %793 = vmatprep.subr.mxu0 %v720
      %794 = vmatpush1.msra.mxu0 %v719
      %795 = vmatprep.subr.mxu0 %v723
      %796 = vmatpush1.msra.mxu0 %v722
      %797 = vmatprep.subr.mxu0 %v726
      %798 = vmatpush1.msra.mxu0 %v725
      %799 = vmatprep.subr.mxu0 %v729
      %800 = vmatpush1.msra.mxu0 %v728
      %801 = vmatprep.subr.mxu0 %v732
      %802 = vmatpush1.msra.mxu0 %v731
      %803 = vmatprep.subr.mxu0 %v735
      %804 = vmatpush1.msra.mxu0 %v734
      %805 = vmatprep.subr.mxu0 0.0
      %806 = vmatpush1.msra.mxu0 0.0
      %807 = vmatprep.subr.mxu0 0.0
      %808 = vmatpush1.msra.mxu0 0.0
      %809 = vmatprep.subr.mxu0 0.0
      %810 = vmatpush1.msra.mxu0 0.0
      %811 = vmatprep.subr.mxu0 0.0
      %812 = vmatpush1.msra.mxu0 0.0
      %813 = vmatprep.subr.mxu0 0.0
      %814 = vmatpush1.msra.mxu0 0.0
      %815 = vmatprep.subr.mxu0 0.0
      %816 = vmatpush1.msra.mxu0 0.0
      %817 = vmatprep.subr.mxu0 0.0
      %818 = vmatpush1.msra.mxu0 0.0
      %819 = vmatprep.subr.mxu0 0.0
      %820 = vmatpush1.msra.mxu0 0.0
      %821 = vmatprep.mubr.f32.mxu0 %v755
      %822 = vmatmul.mubr.f32.gmra.mrb[0].mxu0 %v663
      %v823 = vpop.f32.mrb[0].mxu0
      %v824 = vadd.f32 %v742, %v823
      %v825 = vpop.f32.mrb[0].mxu0
      %v826 = vadd.f32 %v746, %v825
      %827 = vdwg.mxu0
      %828 = vmatprep.subr.mxu0 0.0
      %829 = vmatpush1.msra.mxu0 %v667
      %830 = vmatprep.subr.mxu0 0.0
      %831 = vmatpush1.msra.mxu0 %v670
      %832 = vmatprep.subr.mxu0 0.0
      %833 = vmatpush1.msra.mxu0 %v673
      %834 = vmatprep.subr.mxu0 0.0
      %835 = vmatpush1.msra.mxu0 %v676
      %836 = vmatprep.subr.mxu0 0.0
      %837 = vmatpush1.msra.mxu0 %v679
      %838 = vmatprep.subr.mxu0 0.0
      %839 = vmatpush1.msra.mxu0 %v682
      %840 = vmatprep.subr.mxu0 0.0
      %841 = vmatpush1.msra.mxu0 %v685
      %842 = vmatprep.subr.mxu0 0.0
      %843 = vmatpush1.msra.mxu0 %v688
      %844 = vmatprep.subr.mxu0 0.0
      %845 = vmatpush1.msra.mxu0 %v691
      %846 = vmatprep.subr.mxu0 0.0
      %847 = vmatpush1.msra.mxu0 %v694
      %848 = vmatprep.subr.mxu0 0.0
      %849 = vmatpush1.msra.mxu0 %v697
      %850 = vmatprep.subr.mxu0 0.0
      %851 = vmatpush1.msra.mxu0 %v700
      %852 = vmatprep.subr.mxu0 0.0
      %853 = vmatpush1.msra.mxu0 %v703
      %854 = vmatprep.subr.mxu0 0.0
      %855 = vmatpush1.msra.mxu0 %v706
      %856 = vmatprep.subr.mxu0 0.0
      %857 = vmatpush1.msra.mxu0 %v709
      %858 = vmatprep.subr.mxu0 0.0
      %859 = vmatpush1.msra.mxu0 %v712
      %860 = vmatprep.subr.mxu0 0.0
      %861 = vmatpush1.msra.mxu0 %v715
      %862 = vmatprep.subr.mxu0 0.0
      %863 = vmatpush1.msra.mxu0 %v718
      %864 = vmatprep.subr.mxu0 0.0
      %865 = vmatpush1.msra.mxu0 %v721
      %866 = vmatprep.subr.mxu0 0.0
      %867 = vmatpush1.msra.mxu0 %v724
      %868 = vmatprep.subr.mxu0 0.0
      %869 = vmatpush1.msra.mxu0 %v727
      %870 = vmatprep.subr.mxu0 0.0
      %871 = vmatpush1.msra.mxu0 %v730
      %872 = vmatprep.subr.mxu0 0.0
      %873 = vmatpush1.msra.mxu0 %v733
      %874 = vmatprep.subr.mxu0 0.0
      %875 = vmatpush1.msra.mxu0 %v736
      %876 = vmatprep.subr.mxu0 0.0
      %877 = vmatpush1.msra.mxu0 0.0
      %878 = vmatprep.subr.mxu0 0.0
      %879 = vmatpush1.msra.mxu0 0.0
      %880 = vmatprep.subr.mxu0 0.0
      %881 = vmatpush1.msra.mxu0 0.0
      %882 = vmatprep.subr.mxu0 0.0
      %883 = vmatpush1.msra.mxu0 0.0
      %884 = vmatprep.subr.mxu0 0.0
      %885 = vmatpush1.msra.mxu0 0.0
      %886 = vmatprep.subr.mxu0 0.0
      %887 = vmatpush1.msra.mxu0 0.0
      %888 = vmatprep.subr.mxu0 0.0
      %889 = vmatpush1.msra.mxu0 0.0
      %890 = vmatprep.subr.mxu0 0.0
      %891 = vmatpush1.msra.mxu0 0.0
      %892 = vmatprep.mubr.f32.mxu0 %v755
      %893 = vmatmul.mubr.f32.gmra.mrb[0].mxu0 %v663
      %v894 = vpop.f32.mrb[0].mxu0
      %v895 = vadd.f32 %v750, %v894
      %v896 = vpop.f32.mrb[0].mxu0
      %897 = vdwg.mxu0
      %v898 = vxor.u32 %v824, 2147483648
      %v899 = vxor.u32 %v826, 2147483648
      %v900 = vmul.f32 %v898, 1.442695
      %v901 = vpow.pop %v900
      %v902 = vmul.f32 %v899, 1.442695
      %v903 = vpow.pop %v902
      %v904 = vadd.f32 %v901, 1.0
      %v905 = vadd.f32 %v903, 1.0
      %v906 = vrcp.pop %v904
      %v907 = vmul.f32 1.0, %v906
      %v908 = vrcp.pop %v905
      %v909 = vmul.f32 1.0, %v908
      %912 = vrot.lane.b32.xlu0 %v907, 32
      %v913 = vpop.permute.xlu0 %912
      %914 = vrot.lane.b32.xlu0 %v909, 32
      %v915 = vpop.permute.xlu0 %914
      %v916 = vsel %vm473, %v913, %v915
      %v918 = vadd.f32 %v824, %v916
      %921 = vrot.lane.b32.xlu0 %v826, 64
      %v922 = vpop.permute.xlu0 %921
      %923 = vrot.lane.b32.xlu0 %v895, 64
      %v924 = vpop.permute.xlu0 %923
      %v925 = vsel %vm483, %v922, %v924
      %v927 = vadd.f32 %v918, %v925
      %v928 = vmax.f32 %v927, 0.0
      %929 = vst.msk [vmem:[%s273] sm:$0xff] %vm512, %v928
      %p930 = scmp.lt.s32.totalorder %s18, 1
      %s931 = scalar_select %p930, %s18, 1
      %s932 = smul.addr %s931, 8
      %s933 = scalar_lea.vmem %s7, %s932
      // Predicated region
      $region49: #{stgcn_block_forward.2} parent=47 // pred_check
        %p934 = pneg %p188
      $region50: #{stgcn_block_forward.2} parent=47 // pred_check_branch
        %936 = sbr.rel (%p934) target = $region52
      $region51: #{stgcn_block_forward.2} parent=47 // pred_region
        _
      $region52: #{stgcn_block_forward.2} parent=47 // pred_fallthru
        _
    $region48: #{stgcn_block_forward.2} parent=5 // pred_fallthru
      _
    %p937 = scmp.le.s32.totalorder 2, %s13
    // Predicated region
    $region53: #{stgcn_block_forward.2} parent=5 // pred_check
      %p938 = pneg %p937
    $region54: #{stgcn_block_forward.2} parent=5 // pred_check_branch
      %940 = sbr.rel (%p938) target = $region56
    $region55: #{stgcn_block_forward.2} parent=5 // pred_region
      %s941 = ssub.s32 %s13, 2
      // Predicated region
      $region57: #{stgcn_block_forward.2} parent=55 // pred_check
        %p942 = pneg %p194
      $region58: #{stgcn_block_forward.2} parent=55 // pred_check_branch
        %944 = sbr.rel (%p942) target = $region60
      $region59: #{stgcn_block_forward.2} parent=55 // pred_region
        %p945 = scmp.lt.s32.totalorder %s19, 1
        %s946 = scalar_select %p945, %s19, 1
        %s947 = smul.addr %s946, 8
        %s948 = scalar_lea.vmem %s7, %s947
      $region60: #{stgcn_block_forward.2} parent=55 // pred_fallthru
        _
    $region56: #{stgcn_block_forward.2} parent=5 // pred_fallthru
      _
  $region6: #{stgcn_block_forward.2} parent=0 // loop_footer
    %s17 = sadd.s32 1, %s13
  $region7: #{stgcn_block_forward.2} parent=0 // loop_footer_branch
    %12 = sbr.rel target = $region3
  $region8: #{stgcn_block_forward.2} parent=0 // loop_exit
    _

</llo_original>
